<compile_context>
chip_gen: v6e
topology: v6e:2x2x1
jax: 0.10.0
libtpu: 0.0.40
codegen_flags: <defaults>
</compile_context>

<pallas_src>
import jax
import jax.numpy as jnp
from jax.experimental import pallas as pl
from jax.experimental.pallas import tpu as pltpu


_SMALL_K = 8          # Cin <= this -> VPU broadcast-FMA path instead of MXU
_BN_EPS = 1e-5


# ----------------------------------------------------------------------------
# Kernel factory: one grid step pushes one (Cin, tile_n) block of points
# through the whole fused MLP (all 1x1 convs, folded BN, ReLUs) and writes a
# (Cout, tile_n) block of the channels-first output.
# ----------------------------------------------------------------------------
def _make_mlp_conv_kernel(num_layers):
    def kernel(x_ref, *refs):
        out_ref = refs[-1]
        wb_refs = refs[:-1]                      # w0, b0, w1, b1, ...

        h = x_ref[0]                             # (Cin, TN), f32 input block
        for li in range(num_layers):
            w_ref = wb_refs[2 * li]              # (Cout, Cin)
            b_ref = wb_refs[2 * li + 1]          # (Cout, 1), f32
            cin = w_ref.shape[1]

            if cin <= _SMALL_K:
                # tiny-K conv: unrolled broadcast FMAs on the VPU in f32,
                # bias fused into the first FMA (no zero-fill / bias pass).
                xin = h.astype(jnp.float32)
                w = w_ref[...].astype(jnp.float32)
                acc = w[:, 0:1] * xin[0:1, :] + b_ref[...]
                for k in range(1, cin):
                    acc = acc + w[:, k:k + 1] * xin[k:k + 1, :]
            else:
                # MXU matmul: bf16 operands, f32 accumulation, f32 epilogue.
                # (astype is a no-op when h is already bf16 from the previous
                #  layer -> exactly one cast per layer.)
                acc = jnp.dot(w_ref[...], h.astype(jnp.bfloat16),
                              preferred_element_type=jnp.float32) + b_ref[...]

            if li < num_layers - 1:
                acc = jnp.maximum(acc, 0.0)      # f32 bias+ReLU (v5e-safe)
                h = acc.astype(jnp.bfloat16)     # bf16 inter-layer activation
            else:
                h = acc

        out_ref[0] = h.astype(out_ref.dtype)

    return kernel


# ----------------------------------------------------------------------------
# Parameter folding (BN eval-mode scale/shift folded into conv weight/bias).
# Input: list of torch-style layer dicts {w:(Cout,Cin), b:(Cout,), gamma,
# beta, rm, rv} (BN entries absent for the last layer).
# Output: [(w:(Cout,Cin) f32, b:(Cout,1) f32), ...] ready for the kernel.
# ----------------------------------------------------------------------------
def fold_mlp_conv_params(layers, bn=True):
    folded = []
    n = len(layers)
    for i, layer in enumerate(layers):
        w = jnp.asarray(layer["w"], jnp.float32)            # (Cout, Cin)
        b = jnp.asarray(layer["b"], jnp.float32)             # (Cout,)
        if bn and i < n - 1:
            inv = layer["gamma"] / jnp.sqrt(layer["rv"] + _BN_EPS)
            shift = layer["beta"] - layer["rm"] * inv
            w = w * inv[:, None]
            b = b * inv + shift
        folded.append((w, b[:, None]))                       # bias (Cout, 1)
    return folded


# ----------------------------------------------------------------------------
# Wrapper: layout plumbing + pallas_call with BlockSpecs / grid.
# x: (B, Cin, N)  (torch Conv1d layout)  ->  (B, Cout, N) channels-first.
# ----------------------------------------------------------------------------
def mlp_conv_forward(x, folded_params, *, tile_n=512, out_dtype=None):
    B, Cin, N = x.shape
    num_layers = len(folded_params)
    Cout = folded_params[-1][0].shape[0]
    out_dtype = x.dtype if out_dtype is None else out_dtype

    # Lane tile: multiple of 128 (ideally 256 for v6e/v7x MXU), no larger than
    # the (padded) point count, and keep the grid at >= 2 steps so both v7x
    # TensorCores get work under the "parallel" dimension semantics.
    n_pad128 = pl.cdiv(N, 128) * 128
    tile_n = max(128, (tile_n // 128) * 128)
    tile_n = min(tile_n, n_pad128)
    if B * pl.cdiv(n_pad128, tile_n) < 2 and tile_n > 128:
        tile_n = max(128, (pl.cdiv(n_pad128, 2) // 128) * 128)

    Np = pl.cdiv(N, tile_n) * tile_n
    xin = x.astype(jnp.float32)
    if Np != N:
        xin = jnp.pad(xin, ((0, 0), (0, 0), (0, Np - N)))    # ragged tail

    # Weight/bias operands: bf16 weights for MXU layers, f32 for tiny-K layer.
    weight_args = []
    for (w, b) in folded_params:
        cin = w.shape[1]
        w = w.astype(jnp.float32 if cin <= _SMALL_K else jnp.bfloat16)
        weight_args += [w, b.astype(jnp.float32)]

    def const_spec(a):
        # constant across the grid (index_map always (0, 0))
        return pl.BlockSpec(a.shape, lambda b, i: (0, 0))

    grid = (B, Np // tile_n)
    grid_spec = pltpu.PrefetchScalarGridSpec(
        num_scalar_prefetch=0,
        grid=grid,
        in_specs=[pl.BlockSpec((1, Cin, tile_n), lambda b, i: (b, 0, i))]
                 + [const_spec(a) for a in weight_args],
        out_specs=pl.BlockSpec((1, Cout, tile_n), lambda b, i: (b, 0, i)),
    )

    # Cost estimate so XLA can schedule surrounding ops against the kernel.
    out_itemsize = jnp.dtype(out_dtype).itemsize
    param_bytes = sum(int(a.size) * a.dtype.itemsize for a in weight_args)
    flops = 2 * B * Np * sum(w.shape[0] * w.shape[1] for w, _ in folded_params)
    bytes_accessed = int(xin.size) * 4 + B * Cout * Np * out_itemsize + param_bytes
    cost = pl.CostEstimate(flops=int(flops), transcendentals=0,
                           bytes_accessed=int(bytes_accessed))

    # Explicit VMEM budget: double-buffered in/out blocks + (double-buffered)
    # params + per-layer intermediates, with headroom; capped at v7x's 64 MiB.
    max_c = max(max(w.shape) for w, _ in folded_params)
    est = (2 * tile_n * Cin * 4                      # input blocks
           + 2 * tile_n * Cout * out_itemsize        # output blocks
           + 2 * param_bytes                         # weights/biases
           + 4 * tile_n * max_c * 4)                 # intermediates (f32, slack)
    vmem_limit = int(min(max(4 * est, 32 * 1024 * 1024), 64 * 1024 * 1024))

    out = pl.pallas_call(
        _make_mlp_conv_kernel(num_layers),
        out_shape=jax.ShapeDtypeStruct((B, Cout, Np), out_dtype),
        grid_spec=grid_spec,
        compiler_params=pltpu.CompilerParams(
            dimension_semantics=("parallel", "parallel"),
            vmem_limit_bytes=vmem_limit),
        cost_estimate=cost,
    )(xin, *weight_args)

    if Np != N:
        out = out[:, :, :N]
    return out                                            # (B, Cout, N)


# ----------------------------------------------------------------------------
# Pure-JAX reference mirroring the torch module (Conv1d + eval-mode BN + ReLU).
# ----------------------------------------------------------------------------
def mlp_conv_reference(x, layers, bn=True):
    h = x.astype(jnp.float32)
    n = len(layers)
    for i, layer in enumerate(layers):
        w = jnp.asarray(layer["w"], jnp.float32)          # (Cout, Cin)
        b = jnp.asarray(layer["b"], jnp.float32)
        h = jnp.einsum("oc,bcn->bon", w, h) + b[None, :, None]
        if i < n - 1:
            if bn:
                inv = layer["gamma"] / jnp.sqrt(layer["rv"] + _BN_EPS)
                shift = layer["beta"] - layer["rm"] * inv
                h = h * inv[None, :, None] + shift[None, :, None]
            h = jnp.maximum(h, 0.0)
    return h


# ----------------------------------------------------------------------------
# Deterministic synthetic torch-style parameters.
# ----------------------------------------------------------------------------
def make_params(key, in_channel, layer_dims):
    layers = []
    last = in_channel
    ks = list(jax.random.split(key, len(layer_dims) * 6))
    idx = 0

    def nrm(shape, scale=0.05):
        nonlocal idx
        v = scale * jax.random.normal(ks[idx], shape, dtype=jnp.float32)
        idx += 1
        return v

    for i, out_c in enumerate(layer_dims):
        layer = dict(w=nrm((out_c, last)), b=nrm((out_c,)))
        if i < len(layer_dims) - 1:
            layer["gamma"] = 1.0 + nrm((out_c,))
            layer["beta"] = nrm((out_c,))
            layer["rm"] = nrm((out_c,))
            layer["rv"] = 0.5 + jnp.abs(nrm((out_c,)))
        layers.append(layer)
        last = out_c
    return layers


if __name__ == "__main__":
    key = jax.random.PRNGKey(0)
    k_x, k_p = jax.random.split(key)

    # small shapes: MLP_CONV(in_channel=3, layer_dims=[64, 128]) on (B=2, 3, N=512)
    B, Cin, N = 2, 3, 512
    layer_dims = [64, 128]

    x = jax.random.normal(k_x, (B, Cin, N), dtype=jnp.float32)
    layers = make_params(k_p, Cin, layer_dims)
    folded = fold_mlp_conv_params(layers, bn=True)

    out = jax.block_until_ready(mlp_conv_forward(x, folded, tile_n=512))
    assert out.shape == (B, layer_dims[-1], N), out.shape

    ref = jax.block_until_ready(mlp_conv_reference(x, layers, bn=True))
    max_err = float(jnp.max(jnp.abs(out - ref)))
    # bf16 MXU operands / bf16 inter-layer activations with f32 accumulation
    # -> relaxed tolerance vs the f32 reference.
    assert jnp.allclose(out, ref, atol=2e-3, rtol=2e-2), max_err

    print("KERNEL_OK")
</pallas_src>

<mosaic_0001>
module attributes {stable_mosaic.version = 11 : i64} {
  func.func @kernel(%arg0: i32, %arg1: i32, %arg2: memref<1x3x512xf32, #tpu.memory_space<vmem>>, %arg3: memref<64x3xf32, #tpu.memory_space<vmem>>, %arg4: memref<64x1xf32, #tpu.memory_space<vmem>>, %arg5: memref<128x64xbf16, #tpu.memory_space<vmem>>, %arg6: memref<128x1xf32, #tpu.memory_space<vmem>>, %arg7: memref<1x128x512xf32, #tpu.memory_space<vmem>>) attributes {dimension_semantics = [#tpu.dimension_semantics<parallel>, #tpu.dimension_semantics<parallel>], iteration_bounds = array<i64: 2, 1>, scalar_prefetch = 0 : i64, scratch_operands = 0 : i64, tpu.core_type = #tpu.core_type<tc>, window_params = [{transform_indices = @transform_0, window_bounds = array<i64: 1, 3, 512>}, {pipeline_mode = #tpu.pipeline_mode<synchronous>, transform_indices = @transform_1, window_bounds = array<i64: 64, 3>}, {pipeline_mode = #tpu.pipeline_mode<synchronous>, transform_indices = @transform_2, window_bounds = array<i64: 64, 1>}, {pipeline_mode = #tpu.pipeline_mode<synchronous>, transform_indices = @transform_3, window_bounds = array<i64: 128, 64>}, {pipeline_mode = #tpu.pipeline_mode<synchronous>, transform_indices = @transform_4, window_bounds = array<i64: 128, 1>}, {transform_indices = @transform_5, window_bounds = array<i64: 1, 128, 512>}]} {
    %c0 = arith.constant 0 : index
    %c0_0 = arith.constant 0 : index
    %c0_1 = arith.constant 0 : index
    %0 = vector.load %arg2[%c0, %c0_0, %c0_1] : memref<1x3x512xf32, #tpu.memory_space<vmem>>, vector<1x3x512xf32>
    %1 = vector.shape_cast %0 : vector<1x3x512xf32> to vector<3x512xf32>
    %c0_2 = arith.constant 0 : index
    %c0_3 = arith.constant 0 : index
    %2 = vector.load %arg3[%c0_2, %c0_3] : memref<64x3xf32, #tpu.memory_space<vmem>>, vector<64x3xf32>
    %3 = vector.extract_strided_slice %2 {offsets = [0, 0], sizes = [64, 1], strides = [1, 1]} : vector<64x3xf32> to vector<64x1xf32>
    %4 = vector.extract_strided_slice %1 {offsets = [0, 0], sizes = [1, 512], strides = [1, 1]} : vector<3x512xf32> to vector<1x512xf32>
    %5 = vector.broadcast %3 : vector<64x1xf32> to vector<64x512xf32>
    %6 = vector.broadcast %4 : vector<1x512xf32> to vector<64x512xf32>
    %7 = arith.mulf %5, %6 : vector<64x512xf32>
    %c0_4 = arith.constant 0 : index
    %c0_5 = arith.constant 0 : index
    %8 = vector.load %arg4[%c0_4, %c0_5] : memref<64x1xf32, #tpu.memory_space<vmem>>, vector<64x1xf32>
    %9 = vector.broadcast %8 : vector<64x1xf32> to vector<64x512xf32>
    %10 = arith.addf %7, %9 : vector<64x512xf32>
    %11 = vector.extract_strided_slice %2 {offsets = [0, 1], sizes = [64, 1], strides = [1, 1]} : vector<64x3xf32> to vector<64x1xf32>
    %12 = vector.extract_strided_slice %1 {offsets = [1, 0], sizes = [1, 512], strides = [1, 1]} : vector<3x512xf32> to vector<1x512xf32>
    %13 = vector.broadcast %11 : vector<64x1xf32> to vector<64x512xf32>
    %14 = vector.broadcast %12 : vector<1x512xf32> to vector<64x512xf32>
    %15 = arith.mulf %13, %14 : vector<64x512xf32>
    %16 = arith.addf %10, %15 : vector<64x512xf32>
    %17 = vector.extract_strided_slice %2 {offsets = [0, 2], sizes = [64, 1], strides = [1, 1]} : vector<64x3xf32> to vector<64x1xf32>
    %18 = vector.extract_strided_slice %1 {offsets = [2, 0], sizes = [1, 512], strides = [1, 1]} : vector<3x512xf32> to vector<1x512xf32>
    %19 = vector.broadcast %17 : vector<64x1xf32> to vector<64x512xf32>
    %20 = vector.broadcast %18 : vector<1x512xf32> to vector<64x512xf32>
    %21 = arith.mulf %19, %20 : vector<64x512xf32>
    %22 = arith.addf %16, %21 : vector<64x512xf32>
    %cst = arith.constant 0.000000e+00 : f32
    %23 = vector.broadcast %cst : f32 to vector<64x512xf32>
    %24 = arith.maximumf %22, %23 : vector<64x512xf32>
    %25 = arith.truncf %24 : vector<64x512xf32> to vector<64x512xbf16>
    %c0_6 = arith.constant 0 : index
    %c0_7 = arith.constant 0 : index
    %26 = vector.load %arg5[%c0_6, %c0_7] : memref<128x64xbf16, #tpu.memory_space<vmem>>, vector<128x64xbf16>
    %cst_8 = arith.constant dense<0.000000e+00> : vector<128x512xf32>
    %27 = tpu.matmul %26, %25, %cst_8 {dimension_numbers = #tpu.dot_dimension_numbers<[1], [0], [0], [1], [0, 0, 1, 1], [], []>} : vector<128x64xbf16>, vector<64x512xbf16>, vector<128x512xf32> -> vector<128x512xf32>
    %c0_9 = arith.constant 0 : index
    %c0_10 = arith.constant 0 : index
    %28 = vector.load %arg6[%c0_9, %c0_10] : memref<128x1xf32, #tpu.memory_space<vmem>>, vector<128x1xf32>
    %29 = vector.broadcast %28 : vector<128x1xf32> to vector<128x512xf32>
    %30 = arith.addf %27, %29 : vector<128x512xf32>
    %c0_11 = arith.constant 0 : index
    %c0_12 = arith.constant 0 : index
    %c0_13 = arith.constant 0 : index
    %31 = vector.load %arg7[%c0_11, %c0_12, %c0_13] : memref<1x128x512xf32, #tpu.memory_space<vmem>>, vector<1x128x512xf32>
    %32 = vector.shape_cast %31 : vector<1x128x512xf32> to vector<128x512xf32>
    %33 = vector.shape_cast %30 : vector<128x512xf32> to vector<1x128x512xf32>
    tpu.vector_store %arg7[%c0_11, %c0_12, %c0_13], %33 {strides = array<i32>} : memref<1x128x512xf32, #tpu.memory_space<vmem>>, vector<1x128x512xf32>,
    return
  }
  func.func @transform_0(%arg0: i32, %arg1: i32) -> (i32, i32, i32) {
    %c0_i32 = arith.constant 0 : i32
    %c0_i32_0 = arith.constant 0 : i32
    return %arg0, %c0_i32, %arg1 : i32, i32, i32
  }
  func.func @transform_1(%arg0: i32, %arg1: i32) -> (i32, i32) {
    %c0_i32 = arith.constant 0 : i32
    %c0_i32_0 = arith.constant 0 : i32
    %c0_i32_1 = arith.constant 0 : i32
    return %c0_i32, %c0_i32_0 : i32, i32
  }
  func.func @transform_2(%arg0: i32, %arg1: i32) -> (i32, i32) {
    %c0_i32 = arith.constant 0 : i32
    %c0_i32_0 = arith.constant 0 : i32
    %c0_i32_1 = arith.constant 0 : i32
    return %c0_i32, %c0_i32_0 : i32, i32
  }
  func.func @transform_3(%arg0: i32, %arg1: i32) -> (i32, i32) {
    %c0_i32 = arith.constant 0 : i32
    %c0_i32_0 = arith.constant 0 : i32
    %c0_i32_1 = arith.constant 0 : i32
    return %c0_i32, %c0_i32_0 : i32, i32
  }
  func.func @transform_4(%arg0: i32, %arg1: i32) -> (i32, i32) {
    %c0_i32 = arith.constant 0 : i32
    %c0_i32_0 = arith.constant 0 : i32
    %c0_i32_1 = arith.constant 0 : i32
    return %c0_i32, %c0_i32_0 : i32, i32
  }
  func.func @transform_5(%arg0: i32, %arg1: i32) -> (i32, i32, i32) {
    %c0_i32 = arith.constant 0 : i32
    %c0_i32_0 = arith.constant 0 : i32
    return %arg0, %c0_i32, %arg1 : i32, i32, i32
  }
}

</mosaic_0001>

<llo_original>
// kernel: tpu_custom_call.1
$region0: #{tpu_custom_call.1}
  #allocation0 [shape = 'u32[]', space=smem, size = 0x4, offset = 0x4, fixed_abs, tag = 'smem constant byte address 0x4 - core index']
  #allocation1 [shape = 'u32[144,128]{1,0:T(1,128)}', space=vmem, size = 0x12000, scoped, tag = 'internal scratch']
  %s0 = inlined_call_operand.vmem [shape: f32[2,3,512], index: 0, kind: input, shape index: {}]
  %s1 = inlined_call_operand.vmem [shape: f32[64,3], index: 1, kind: input, shape index: {}]
  %s2 = inlined_call_operand.vmem [shape: f32[64,1], index: 2, kind: input, shape index: {}]
  %s3 = inlined_call_operand.vmem [shape: bf16[128,64], index: 3, kind: input, shape index: {}]
  %s4 = inlined_call_operand.vmem [shape: f32[128,1], index: 4, kind: input, shape index: {}]
  %s5 = inlined_call_operand.hbm [shape: f32[2,128,512], index: 5, kind: output, shape index: {}]
  %s6 = sld [smem:[#allocation0]]
  $region53: #{tpu_custom_call.1} parent=0
    _
  %s8 = ssub.s32 1, %s6
  %s9 = scalar_select 0, %s8, %s6
  $region1: #{tpu_custom_call.1} parent=0
    #allocation2 [shape = 'u8[524288]{0}', space=vmem, size = 0x80000, scoped, tag = 'output window, operand 0']
    #allocation3 [shape = 's32[2]{0}', space=sflag, size = 0x8, scoped, tag = 'scoped memory for tpu_custom_call.1']
    %10 = vsyncpa [#allocation3], 0
    %s11 = scalar_lea.sflag [#allocation3], 1
    %12 = vsyncpa %s11, 0
    loop: start=0, step=1, limit=4
    $region2: #{tpu_custom_call.1} parent=1 // loop_pre_header
      _
    $region3: #{tpu_custom_call.1} parent=1 // loop_header
      %s14 = sphi 0, %s18
      %p15 = scmp.ge.s32.totalorder %s14, 4
      %s21 = sphi 0, %s33
      %s22 = sphi 0, %s29
      %s23 = sphi 0, %s21
      %s24 = sphi 0, %s22
      %s25 = sphi 0, %s23
      %s26 = sphi 0, %s24
      %s38 = sphi 0, %s40
      %s41 = sphi 0, %s38
      %s42 = sphi 0, %s41
      %s58 = sphi 0, %s42
      %s62 = sphi 0, %s62
      %s64 = sphi 0, %s62
      %s65 = sphi 0, %s64
      %s79 = sphi 0, %s65
      %s83 = sphi 0, %s83
      %s85 = sphi 0, %s83
      %s86 = sphi 0, %s85
      %s100 = sphi 0, %s86
      %s104 = sphi 0, %s104
      %s106 = sphi 0, %s104
      %s107 = sphi 0, %s106
      %s121 = sphi 0, %s107
      %s125 = sphi 0, %s125
      %s127 = sphi 0, %s125
      %s128 = sphi 0, %s127
      %s142 = sphi 0, %s128
      %s150 = sphi 0, %s152
      %s153 = sphi 0, %s150
      %s154 = sphi 0, %s153
      %s170 = sphi 0, %s154
    $region4: #{tpu_custom_call.1} parent=1 // loop_header_branch
      %17 = sbr.rel (%p15) target = $region8
    $region5: #{tpu_custom_call.1} parent=1 // loop_body
      %s19 = ssub.s32 %s14, 1
      %s20 = ssub.s32 %s14, 2
      %s27 = sadd.s32 1, %s22
      %p28 = scmp.ge.s32.totalorder %s27, 1
      %s29 = scalar_select %p28, 0, %s27
      %s30 = sadd.s32 1, %s21
      %s31 = scalar_select %p28, %s30, %s21
      %p32 = scmp.ge.s32.totalorder %s31, 2
      %s33 = scalar_select %p32, 0, %s31
      %s34 = ssub.s32 %s21, %s33
      %s35 = ssub.s32 %s22, %s29
      %s36 = sor.u32 %s34, %s35
      %p37 = scmp.eq.s32.totalorder %s36, 0
      %s39 = sadd.s32 %s38, 1
      %s40 = scalar_select %p37, %s38, %s39
      %p43 = pneg %p37
      %p44 = scmp.eq.s32.totalorder %s14, 1
      %p45 = por %p43, %p44
      %p46 = scmp.ne.s32.totalorder %s38, %s41
      %p47 = scmp.eq.s32.totalorder %s14, 0
      %p48 = por %p46, %p47
      %p49 = scmp.ne.s32.totalorder %s38, %s41
      %p50 = scmp.eq.s32.totalorder %s19, 1
      %p51 = por %p49, %p50
      %p52 = scmp.ne.s32.totalorder %s41, %s42
      %p53 = scmp.eq.s32.totalorder %s19, 0
      %p54 = por %p52, %p53
      %p55 = scmp.ne.s32.totalorder %s41, %s42
      %p56 = scmp.eq.s32.totalorder %s20, 1
      %p57 = por %p55, %p56
      %p59 = scmp.ne.s32.totalorder %s42, %s58
      %p60 = scmp.eq.s32.totalorder %s20, 0
      %p61 = por %p59, %p60
      %s63 = sadd.s32 %s62, 1
      %p66 = scmp.eq.s32.totalorder %s14, 1
      %p67 = scmp.ne.s32.totalorder %s62, %s64
      %p68 = scmp.eq.s32.totalorder %s14, 0
      %p69 = por %p67, %p68
      %p70 = scmp.ne.s32.totalorder %s62, %s64
      %p71 = scmp.eq.s32.totalorder %s19, 1
      %p72 = por %p70, %p71
      %p73 = scmp.ne.s32.totalorder %s64, %s65
      %p74 = scmp.eq.s32.totalorder %s19, 0
      %p75 = por %p73, %p74
      %p76 = scmp.ne.s32.totalorder %s64, %s65
      %p77 = scmp.eq.s32.totalorder %s20, 1
      %p78 = por %p76, %p77
      %p80 = scmp.ne.s32.totalorder %s65, %s79
      %p81 = scmp.eq.s32.totalorder %s20, 0
      %p82 = por %p80, %p81
      %s84 = sadd.s32 %s83, 1
      %p87 = scmp.eq.s32.totalorder %s14, 1
      %p88 = scmp.ne.s32.totalorder %s83, %s85
      %p89 = scmp.eq.s32.totalorder %s14, 0
      %p90 = por %p88, %p89
      %p91 = scmp.ne.s32.totalorder %s83, %s85
      %p92 = scmp.eq.s32.totalorder %s19, 1
      %p93 = por %p91, %p92
      %p94 = scmp.ne.s32.totalorder %s85, %s86
      %p95 = scmp.eq.s32.totalorder %s19, 0
      %p96 = por %p94, %p95
      %p97 = scmp.ne.s32.totalorder %s85, %s86
      %p98 = scmp.eq.s32.totalorder %s20, 1
      %p99 = por %p97, %p98
      %p101 = scmp.ne.s32.totalorder %s86, %s100
      %p102 = scmp.eq.s32.totalorder %s20, 0
      %p103 = por %p101, %p102
      %s105 = sadd.s32 %s104, 1
      %p108 = scmp.eq.s32.totalorder %s14, 1
      %p109 = scmp.ne.s32.totalorder %s104, %s106
      %p110 = scmp.eq.s32.totalorder %s14, 0
      %p111 = por %p109, %p110
      %p112 = scmp.ne.s32.totalorder %s104, %s106
      %p113 = scmp.eq.s32.totalorder %s19, 1
      %p114 = por %p112, %p113
      %p115 = scmp.ne.s32.totalorder %s106, %s107
      %p116 = scmp.eq.s32.totalorder %s19, 0
      %p117 = por %p115, %p116
      %p118 = scmp.ne.s32.totalorder %s106, %s107
      %p119 = scmp.eq.s32.totalorder %s20, 1
      %p120 = por %p118, %p119
      %p122 = scmp.ne.s32.totalorder %s107, %s121
      %p123 = scmp.eq.s32.totalorder %s20, 0
      %p124 = por %p122, %p123
      %s126 = sadd.s32 %s125, 1
      %p129 = scmp.eq.s32.totalorder %s14, 1
      %p130 = scmp.ne.s32.totalorder %s125, %s127
      %p131 = scmp.eq.s32.totalorder %s14, 0
      %p132 = por %p130, %p131
      %p133 = scmp.ne.s32.totalorder %s125, %s127
      %p134 = scmp.eq.s32.totalorder %s19, 1
      %p135 = por %p133, %p134
      %p136 = scmp.ne.s32.totalorder %s127, %s128
      %p137 = scmp.eq.s32.totalorder %s19, 0
      %p138 = por %p136, %p137
      %p139 = scmp.ne.s32.totalorder %s127, %s128
      %p140 = scmp.eq.s32.totalorder %s20, 1
      %p141 = por %p139, %p140
      %p143 = scmp.ne.s32.totalorder %s128, %s142
      %p144 = scmp.eq.s32.totalorder %s20, 0
      %p145 = por %p143, %p144
      %s146 = ssub.s32 %s21, %s33
      %s147 = ssub.s32 %s22, %s29
      %s148 = sor.u32 %s146, %s147
      %p149 = scmp.eq.s32.totalorder %s148, 0
      %s151 = sadd.s32 %s150, 1
      %s152 = scalar_select %p149, %s150, %s151
      %p155 = pneg %p149
      %p156 = scmp.eq.s32.totalorder %s14, 1
      %p157 = por %p155, %p156
      %p158 = scmp.ne.s32.totalorder %s150, %s153
      %p159 = scmp.eq.s32.totalorder %s14, 0
      %p160 = por %p158, %p159
      %p161 = scmp.ne.s32.totalorder %s150, %s153
      %p162 = scmp.eq.s32.totalorder %s19, 1
      %p163 = por %p161, %p162
      %p164 = scmp.ne.s32.totalorder %s153, %s154
      %p165 = scmp.eq.s32.totalorder %s19, 0
      %p166 = por %p164, %p165
      %p167 = scmp.ne.s32.totalorder %s153, %s154
      %p168 = scmp.eq.s32.totalorder %s20, 1
      %p169 = por %p167, %p168
      %p171 = scmp.ne.s32.totalorder %s154, %s170
      %p172 = scmp.eq.s32.totalorder %s20, 0
      %p173 = por %p171, %p172
      %p174 = scmp.le.s32.totalorder 1, %s14
      %p175 = scmp.lt.s32.totalorder %s14, 3
      %p176 = pnand %p174, %p175
      %p177 = pneg %p176
      // Predicated region
      $region9: #{tpu_custom_call.1} parent=5 // pred_check
        _
      $region10: #{tpu_custom_call.1} parent=5 // pred_check_branch
        %179 = sbr.rel (%p176) target = $region12
      $region11: #{tpu_custom_call.1} parent=5 // pred_region
        %s180 = ssub.s32 %s14, 1
        // Predicated region
        $region13: #{tpu_custom_call.1} parent=11 // pred_check
          %p181 = pneg %p75
        $region14: #{tpu_custom_call.1} parent=11 // pred_check_branch
          %183 = sbr.rel (%p181) target = $region16
        $region15: #{tpu_custom_call.1} parent=11 // pred_region
          _
        $region16: #{tpu_custom_call.1} parent=11 // pred_fallthru
          _
        // Predicated region
        $region17: #{tpu_custom_call.1} parent=11 // pred_check
          %p184 = pneg %p96
        $region18: #{tpu_custom_call.1} parent=11 // pred_check_branch
          %186 = sbr.rel (%p184) target = $region20
        $region19: #{tpu_custom_call.1} parent=11 // pred_region
          _
        $region20: #{tpu_custom_call.1} parent=11 // pred_fallthru
          _
        // Predicated region
        $region21: #{tpu_custom_call.1} parent=11 // pred_check
          %p187 = pneg %p117
        $region22: #{tpu_custom_call.1} parent=11 // pred_check_branch
          %189 = sbr.rel (%p187) target = $region24
        $region23: #{tpu_custom_call.1} parent=11 // pred_region
          _
        $region24: #{tpu_custom_call.1} parent=11 // pred_fallthru
          _
        // Predicated region
        $region25: #{tpu_custom_call.1} parent=11 // pred_check
          %p190 = pneg %p138
        $region26: #{tpu_custom_call.1} parent=11 // pred_check_branch
          %192 = sbr.rel (%p190) target = $region28
        $region27: #{tpu_custom_call.1} parent=11 // pred_region
          _
        $region28: #{tpu_custom_call.1} parent=11 // pred_fallthru
          _
      $region12: #{tpu_custom_call.1} parent=5 // pred_fallthru
        _
      %p193 = scmp.lt.s32.totalorder %s14, 2
      // Predicated region
      $region29: #{tpu_custom_call.1} parent=5 // pred_check
        %p194 = pneg %p193
      $region30: #{tpu_custom_call.1} parent=5 // pred_check_branch
        %196 = sbr.rel (%p194) target = $region32
      $region31: #{tpu_custom_call.1} parent=5 // pred_region
        // Predicated region
        $region33: #{tpu_custom_call.1} parent=31 // pred_check
          %p197 = pneg %p48
        $region34: #{tpu_custom_call.1} parent=31 // pred_check_branch
          %199 = sbr.rel (%p197) target = $region36
        $region35: #{tpu_custom_call.1} parent=31 // pred_region
          %s200 = smul.u32 4, %s22
          %p201 = scmp.lt.s32.totalorder %s21, 1
          %s202 = scalar_select %p201, %s21, 1
          %p203 = scmp.lt.s32.totalorder %s200, 3
          %s204 = scalar_select %p203, %s200, 3
          %s205 = smul.addr %s202, 4
          %s206 = sadd.s32 %s204, %s205
          %s207 = smul.addr %s206, 4
          %s208 = scalar_lea.vmem %s0, %s207
          %s209 = smul.u32 4, %s22
        $region36: #{tpu_custom_call.1} parent=31 // pred_fallthru
          _
      $region32: #{tpu_custom_call.1} parent=5 // pred_fallthru
        _
      %p210 = scmp.le.s32.totalorder 1, %s14
      %p211 = scmp.lt.s32.totalorder %s14, 3
      %p212 = pnand %p210, %p211
      %p213 = pneg %p212
      // Predicated region
      $region37: #{tpu_custom_call.1} parent=5 // pred_check
        _
      $region38: #{tpu_custom_call.1} parent=5 // pred_check_branch
        %215 = sbr.rel (%p212) target = $region40
      $region39: #{tpu_custom_call.1} parent=5 // pred_region
        %s216 = ssub.s32 %s14, 1
        %s217 = smul.u32 4, %s24
        %p218 = scmp.lt.s32.totalorder %s23, 1
        %s219 = scalar_select %p218, %s23, 1
        %p220 = scmp.lt.s32.totalorder %s217, 3
        %s221 = scalar_select %p220, %s217, 3
        %s222 = smul.addr %s219, 4
        %s223 = sadd.s32 %s221, %s222
        %s224 = smul.addr %s223, 4
        %s225 = scalar_lea.vmem %s0, %s224
        %p226 = pneg %p54
        %p227 = pneg %p51
        %p228 = pneg %p75
        %p229 = pneg %p72
        %p230 = pneg %p96
        %p231 = pneg %p93
        %p232 = pneg %p117
        %p233 = pneg %p114
        %p234 = pneg %p138
        %p235 = pneg %p135
        %p236 = pneg %p166
        %p237 = pneg %p163
        %s238 = sand.u32 %s153, 1
        %s239 = scalar_lea.sflag [#allocation3], %s238
        %s240 = sand.u32 %s153, 1
        %s241 = smul.addr %s240, 512
        %s242 = scalar_lea.vmem [#allocation2], %s241
        %s243 = smul.u32 4, %s24
        %p244 = scmp.lt.s32.totalorder %s23, 1
        %s245 = scalar_select %p244, %s23, 1
        %p246 = scmp.lt.s32.totalorder %s243, 3
        %s247 = scalar_select %p246, %s243, 3
        %s248 = smul.addr %s245, 4
        %s249 = sadd.s32 %s247, %s248
        %s250 = smul.addr %s249, 4
        %s251 = scalar_lea.vmem %s0, %s250
        %s252 = smul.u32 4, %s24
        %s253 = smul.u32 4, %s24
        %v255 = vld [vmem:[%s251] sm:$0x77]
        %v256 = vld [vmem:[%s251 + $0x8] sm:$0x77]
        %v257 = vld [vmem:[%s1] sm:$0xff]
        %v258 = vld [vmem:[%s1 + $0x8] sm:$0xff]
        %v259 = vld [vmem:[%s1 + $0x10] sm:$0xff]
        %v260 = vld [vmem:[%s1 + $0x18] sm:$0xff]
        %v261 = vld [vmem:[%s1 + $0x20] sm:$0xff]
        %v262 = vld [vmem:[%s1 + $0x28] sm:$0xff]
        %v263 = vld [vmem:[%s1 + $0x30] sm:$0xff]
        %v264 = vld [vmem:[%s1 + $0x38] sm:$0xff]
        %266 = vset.pattern.permute.xlu0 0
        %267 = vperm.xlu0 %266, %v257
        %v268 = vpop.permute.xlu0 %267
        %271 = vset.pattern.permute.xlu0 0
        %272 = vperm.xlu0 %271, %v258
        %v273 = vpop.permute.xlu0 %272
        %276 = vset.pattern.permute.xlu0 0
        %277 = vperm.xlu0 %276, %v259
        %v278 = vpop.permute.xlu0 %277
        %281 = vset.pattern.permute.xlu0 0
        %282 = vperm.xlu0 %281, %v260
        %v283 = vpop.permute.xlu0 %282
        %286 = vset.pattern.permute.xlu0 0
        %287 = vperm.xlu0 %286, %v261
        %v288 = vpop.permute.xlu0 %287
        %291 = vset.pattern.permute.xlu0 0
        %292 = vperm.xlu0 %291, %v262
        %v293 = vpop.permute.xlu0 %292
        %296 = vset.pattern.permute.xlu0 0
        %297 = vperm.xlu0 %296, %v263
        %v298 = vpop.permute.xlu0 %297
        %301 = vset.pattern.permute.xlu0 0
        %302 = vperm.xlu0 %301, %v264
        %v303 = vpop.permute.xlu0 %302
        %v307 = vlaneseq
        %v308 = vshrl.u32 %v307, 7
        %v309 = vsub.s32 0, %v308
        %v310 = vrot.slane %v255, %v309
        %v311 = vlaneseq
        %v312 = vshrl.u32 %v311, 7
        %v313 = vsub.s32 4, %v312
        %v314 = vrot.slane %v255, %v313
        %v315 = vlaneseq
        %v316 = vshrl.u32 %v315, 7
        %v317 = vsub.s32 0, %v316
        %v318 = vrot.slane %v256, %v317
        %v319 = vlaneseq
        %v320 = vshrl.u32 %v319, 7
        %v321 = vsub.s32 4, %v320
        %v322 = vrot.slane %v256, %v321
        %v327 = vlaneseq
        %v328 = vshrl.u32 %v327, 7
        %v329 = vsub.s32 0, %v328
        %v330 = vrot.slane %v310, %v329
        %v331 = vlaneseq
        %v332 = vshrl.u32 %v331, 7
        %v333 = vsub.s32 0, %v332
        %v334 = vrot.slane %v314, %v333
        %v335 = vlaneseq
        %v336 = vshrl.u32 %v335, 7
        %v337 = vsub.s32 0, %v336
        %v338 = vrot.slane %v318, %v337
        %v339 = vlaneseq
        %v340 = vshrl.u32 %v339, 7
        %v341 = vsub.s32 0, %v340
        %v342 = vrot.slane %v322, %v341
        %v343 = vmul.f32 %v268, %v330
        %v344 = vmul.f32 %v268, %v334
        %v345 = vmul.f32 %v268, %v338
        %v346 = vmul.f32 %v268, %v342
        %v347 = vmul.f32 %v273, %v330
        %v348 = vmul.f32 %v273, %v334
        %v349 = vmul.f32 %v273, %v338
        %v350 = vmul.f32 %v273, %v342
        %v351 = vmul.f32 %v278, %v330
        %v352 = vmul.f32 %v278, %v334
        %v353 = vmul.f32 %v278, %v338
        %v354 = vmul.f32 %v278, %v342
        %v355 = vmul.f32 %v283, %v330
        %v356 = vmul.f32 %v283, %v334
        %v357 = vmul.f32 %v283, %v338
        %v358 = vmul.f32 %v283, %v342
        %v359 = vmul.f32 %v288, %v330
        %v360 = vmul.f32 %v288, %v334
        %v361 = vmul.f32 %v288, %v338
        %v362 = vmul.f32 %v288, %v342
        %v363 = vmul.f32 %v293, %v330
        %v364 = vmul.f32 %v293, %v334
        %v365 = vmul.f32 %v293, %v338
        %v366 = vmul.f32 %v293, %v342
        %v367 = vmul.f32 %v298, %v330
        %v368 = vmul.f32 %v298, %v334
        %v369 = vmul.f32 %v298, %v338
        %v370 = vmul.f32 %v298, %v342
        %v371 = vmul.f32 %v303, %v330
        %v372 = vmul.f32 %v303, %v334
        %v373 = vmul.f32 %v303, %v338
        %v374 = vmul.f32 %v303, %v342
        %v375 = vld [vmem:[%s2] sm:$0xff]
        %v376 = vld [vmem:[%s2 + $0x8] sm:$0xff]
        %v377 = vld [vmem:[%s2 + $0x10] sm:$0xff]
        %v378 = vld [vmem:[%s2 + $0x18] sm:$0xff]
        %v379 = vld [vmem:[%s2 + $0x20] sm:$0xff]
        %v380 = vld [vmem:[%s2 + $0x28] sm:$0xff]
        %v381 = vld [vmem:[%s2 + $0x30] sm:$0xff]
        %v382 = vld [vmem:[%s2 + $0x38] sm:$0xff]
        %384 = vset.pattern.permute.xlu0 0
        %385 = vperm.xlu0 %384, %v375
        %v386 = vpop.permute.xlu0 %385
        %389 = vset.pattern.permute.xlu0 0
        %390 = vperm.xlu0 %389, %v376
        %v391 = vpop.permute.xlu0 %390
        %394 = vset.pattern.permute.xlu0 0
        %395 = vperm.xlu0 %394, %v377
        %v396 = vpop.permute.xlu0 %395
        %399 = vset.pattern.permute.xlu0 0
        %400 = vperm.xlu0 %399, %v378
        %v401 = vpop.permute.xlu0 %400
        %404 = vset.pattern.permute.xlu0 0
        %405 = vperm.xlu0 %404, %v379
        %v406 = vpop.permute.xlu0 %405
        %409 = vset.pattern.permute.xlu0 0
        %410 = vperm.xlu0 %409, %v380
        %v411 = vpop.permute.xlu0 %410
        %414 = vset.pattern.permute.xlu0 0
        %415 = vperm.xlu0 %414, %v381
        %v416 = vpop.permute.xlu0 %415
        %419 = vset.pattern.permute.xlu0 0
        %420 = vperm.xlu0 %419, %v382
        %v421 = vpop.permute.xlu0 %420
        %v423 = vadd.f32 %v343, %v386
        %v424 = vadd.f32 %v344, %v386
        %v425 = vadd.f32 %v345, %v386
        %v426 = vadd.f32 %v346, %v386
        %v427 = vadd.f32 %v347, %v391
        %v428 = vadd.f32 %v348, %v391
        %v429 = vadd.f32 %v349, %v391
        %v430 = vadd.f32 %v350, %v391
        %v431 = vadd.f32 %v351, %v396
        %v432 = vadd.f32 %v352, %v396
        %v433 = vadd.f32 %v353, %v396
        %v434 = vadd.f32 %v354, %v396
        %v435 = vadd.f32 %v355, %v401
        %v436 = vadd.f32 %v356, %v401
        %v437 = vadd.f32 %v357, %v401
        %v438 = vadd.f32 %v358, %v401
        %v439 = vadd.f32 %v359, %v406
        %v440 = vadd.f32 %v360, %v406
        %v441 = vadd.f32 %v361, %v406
        %v442 = vadd.f32 %v362, %v406
        %v443 = vadd.f32 %v363, %v411
        %v444 = vadd.f32 %v364, %v411
        %v445 = vadd.f32 %v365, %v411
        %v446 = vadd.f32 %v366, %v411
        %v447 = vadd.f32 %v367, %v416
        %v448 = vadd.f32 %v368, %v416
        %v449 = vadd.f32 %v369, %v416
        %v450 = vadd.f32 %v370, %v416
        %v451 = vadd.f32 %v371, %v421
        %v452 = vadd.f32 %v372, %v421
        %v453 = vadd.f32 %v373, %v421
        %v454 = vadd.f32 %v374, %v421
        %455 = vset.pattern.permute.xlu0 1
        %456 = vperm.xlu0 %455, %v257
        %v457 = vpop.permute.xlu0 %456
        %459 = vset.pattern.permute.xlu0 1
        %460 = vperm.xlu0 %459, %v258
        %v461 = vpop.permute.xlu0 %460
        %463 = vset.pattern.permute.xlu0 1
        %464 = vperm.xlu0 %463, %v259
        %v465 = vpop.permute.xlu0 %464
        %467 = vset.pattern.permute.xlu0 1
        %468 = vperm.xlu0 %467, %v260
        %v469 = vpop.permute.xlu0 %468
        %471 = vset.pattern.permute.xlu0 1
        %472 = vperm.xlu0 %471, %v261
        %v473 = vpop.permute.xlu0 %472
        %475 = vset.pattern.permute.xlu0 1
        %476 = vperm.xlu0 %475, %v262
        %v477 = vpop.permute.xlu0 %476
        %479 = vset.pattern.permute.xlu0 1
        %480 = vperm.xlu0 %479, %v263
        %v481 = vpop.permute.xlu0 %480
        %483 = vset.pattern.permute.xlu0 1
        %484 = vperm.xlu0 %483, %v264
        %v485 = vpop.permute.xlu0 %484
        %v487 = vlaneseq
        %v488 = vshrl.u32 %v487, 7
        %v489 = vsub.s32 1, %v488
        %v490 = vrot.slane %v255, %v489
        %v491 = vlaneseq
        %v492 = vshrl.u32 %v491, 7
        %v493 = vsub.s32 5, %v492
        %v494 = vrot.slane %v255, %v493
        %v495 = vlaneseq
        %v496 = vshrl.u32 %v495, 7
        %v497 = vsub.s32 1, %v496
        %v498 = vrot.slane %v256, %v497
        %v499 = vlaneseq
        %v500 = vshrl.u32 %v499, 7
        %v501 = vsub.s32 5, %v500
        %v502 = vrot.slane %v256, %v501
        %v507 = vlaneseq
        %v508 = vshrl.u32 %v507, 7
        %v509 = vsub.s32 1, %v508
        %v510 = vrot.slane %v490, %v509
        %v511 = vlaneseq
        %v512 = vshrl.u32 %v511, 7
        %v513 = vsub.s32 1, %v512
        %v514 = vrot.slane %v494, %v513
        %v515 = vlaneseq
        %v516 = vshrl.u32 %v515, 7
        %v517 = vsub.s32 1, %v516
        %v518 = vrot.slane %v498, %v517
        %v519 = vlaneseq
        %v520 = vshrl.u32 %v519, 7
        %v521 = vsub.s32 1, %v520
        %v522 = vrot.slane %v502, %v521
        %v523 = vmul.f32 %v457, %v510
        %v524 = vmul.f32 %v457, %v514
        %v525 = vmul.f32 %v457, %v518
        %v526 = vmul.f32 %v457, %v522
        %v527 = vmul.f32 %v461, %v510
        %v528 = vmul.f32 %v461, %v514
        %v529 = vmul.f32 %v461, %v518
        %v530 = vmul.f32 %v461, %v522
        %v531 = vmul.f32 %v465, %v510
        %v532 = vmul.f32 %v465, %v514
        %v533 = vmul.f32 %v465, %v518
        %v534 = vmul.f32 %v465, %v522
        %v535 = vmul.f32 %v469, %v510
        %v536 = vmul.f32 %v469, %v514
        %v537 = vmul.f32 %v469, %v518
        %v538 = vmul.f32 %v469, %v522
        %v539 = vmul.f32 %v473, %v510
        %v540 = vmul.f32 %v473, %v514
        %v541 = vmul.f32 %v473, %v518
        %v542 = vmul.f32 %v473, %v522
        %v543 = vmul.f32 %v477, %v510
        %v544 = vmul.f32 %v477, %v514
        %v545 = vmul.f32 %v477, %v518
        %v546 = vmul.f32 %v477, %v522
        %v547 = vmul.f32 %v481, %v510
        %v548 = vmul.f32 %v481, %v514
        %v549 = vmul.f32 %v481, %v518
        %v550 = vmul.f32 %v481, %v522
        %v551 = vmul.f32 %v485, %v510
        %v552 = vmul.f32 %v485, %v514
        %v553 = vmul.f32 %v485, %v518
        %v554 = vmul.f32 %v485, %v522
        %v555 = vadd.f32 %v423, %v523
        %v556 = vadd.f32 %v424, %v524
        %v557 = vadd.f32 %v425, %v525
        %v558 = vadd.f32 %v426, %v526
        %v559 = vadd.f32 %v427, %v527
        %v560 = vadd.f32 %v428, %v528
        %v561 = vadd.f32 %v429, %v529
        %v562 = vadd.f32 %v430, %v530
        %v563 = vadd.f32 %v431, %v531
        %v564 = vadd.f32 %v432, %v532
        %v565 = vadd.f32 %v433, %v533
        %v566 = vadd.f32 %v434, %v534
        %v567 = vadd.f32 %v435, %v535
        %v568 = vadd.f32 %v436, %v536
        %v569 = vadd.f32 %v437, %v537
        %v570 = vadd.f32 %v438, %v538
        %v571 = vadd.f32 %v439, %v539
        %v572 = vadd.f32 %v440, %v540
        %v573 = vadd.f32 %v441, %v541
        %v574 = vadd.f32 %v442, %v542
        %v575 = vadd.f32 %v443, %v543
        %v576 = vadd.f32 %v444, %v544
        %v577 = vadd.f32 %v445, %v545
        %v578 = vadd.f32 %v446, %v546
        %v579 = vadd.f32 %v447, %v547
        %v580 = vadd.f32 %v448, %v548
        %v581 = vadd.f32 %v449, %v549
        %v582 = vadd.f32 %v450, %v550
        %v583 = vadd.f32 %v451, %v551
        %v584 = vadd.f32 %v452, %v552
        %v585 = vadd.f32 %v453, %v553
        %v586 = vadd.f32 %v454, %v554
        %587 = vset.pattern.permute.xlu0 2
        %588 = vperm.xlu0 %587, %v257
        %v589 = vpop.permute.xlu0 %588
        %591 = vset.pattern.permute.xlu0 2
        %592 = vperm.xlu0 %591, %v258
        %v593 = vpop.permute.xlu0 %592
        %595 = vset.pattern.permute.xlu0 2
        %596 = vperm.xlu0 %595, %v259
        %v597 = vpop.permute.xlu0 %596
        %599 = vset.pattern.permute.xlu0 2
        %600 = vperm.xlu0 %599, %v260
        %v601 = vpop.permute.xlu0 %600
        %603 = vset.pattern.permute.xlu0 2
        %604 = vperm.xlu0 %603, %v261
        %v605 = vpop.permute.xlu0 %604
        %607 = vset.pattern.permute.xlu0 2
        %608 = vperm.xlu0 %607, %v262
        %v609 = vpop.permute.xlu0 %608
        %611 = vset.pattern.permute.xlu0 2
        %612 = vperm.xlu0 %611, %v263
        %v613 = vpop.permute.xlu0 %612
        %615 = vset.pattern.permute.xlu0 2
        %616 = vperm.xlu0 %615, %v264
        %v617 = vpop.permute.xlu0 %616
        %v619 = vlaneseq
        %v620 = vshrl.u32 %v619, 7
        %v621 = vsub.s32 2, %v620
        %v622 = vrot.slane %v255, %v621
        %v623 = vlaneseq
        %v624 = vshrl.u32 %v623, 7
        %v625 = vsub.s32 6, %v624
        %v626 = vrot.slane %v255, %v625
        %v627 = vlaneseq
        %v628 = vshrl.u32 %v627, 7
        %v629 = vsub.s32 2, %v628
        %v630 = vrot.slane %v256, %v629
        %v631 = vlaneseq
        %v632 = vshrl.u32 %v631, 7
        %v633 = vsub.s32 6, %v632
        %v634 = vrot.slane %v256, %v633
        %v639 = vlaneseq
        %v640 = vshrl.u32 %v639, 7
        %v641 = vsub.s32 2, %v640
        %v642 = vrot.slane %v622, %v641
        %v643 = vlaneseq
        %v644 = vshrl.u32 %v643, 7
        %v645 = vsub.s32 2, %v644
        %v646 = vrot.slane %v626, %v645
        %v647 = vlaneseq
        %v648 = vshrl.u32 %v647, 7
        %v649 = vsub.s32 2, %v648
        %v650 = vrot.slane %v630, %v649
        %v651 = vlaneseq
        %v652 = vshrl.u32 %v651, 7
        %v653 = vsub.s32 2, %v652
        %v654 = vrot.slane %v634, %v653
        %v655 = vmul.f32 %v589, %v642
        %v656 = vmul.f32 %v589, %v646
        %v657 = vmul.f32 %v589, %v650
        %v658 = vmul.f32 %v589, %v654
        %v659 = vmul.f32 %v593, %v642
        %v660 = vmul.f32 %v593, %v646
        %v661 = vmul.f32 %v593, %v650
        %v662 = vmul.f32 %v593, %v654
        %v663 = vmul.f32 %v597, %v642
        %v664 = vmul.f32 %v597, %v646
        %v665 = vmul.f32 %v597, %v650
        %v666 = vmul.f32 %v597, %v654
        %v667 = vmul.f32 %v601, %v642
        %v668 = vmul.f32 %v601, %v646
        %v669 = vmul.f32 %v601, %v650
        %v670 = vmul.f32 %v601, %v654
        %v671 = vmul.f32 %v605, %v642
        %v672 = vmul.f32 %v605, %v646
        %v673 = vmul.f32 %v605, %v650
        %v674 = vmul.f32 %v605, %v654
        %v675 = vmul.f32 %v609, %v642
        %v676 = vmul.f32 %v609, %v646
        %v677 = vmul.f32 %v609, %v650
        %v678 = vmul.f32 %v609, %v654
        %v679 = vmul.f32 %v613, %v642
        %v680 = vmul.f32 %v613, %v646
        %v681 = vmul.f32 %v613, %v650
        %v682 = vmul.f32 %v613, %v654
        %v683 = vmul.f32 %v617, %v642
        %v684 = vmul.f32 %v617, %v646
        %v685 = vmul.f32 %v617, %v650
        %v686 = vmul.f32 %v617, %v654
        %v687 = vadd.f32 %v555, %v655
        %v688 = vadd.f32 %v556, %v656
        %v689 = vadd.f32 %v557, %v657
        %v690 = vadd.f32 %v558, %v658
        %v691 = vadd.f32 %v559, %v659
        %v692 = vadd.f32 %v560, %v660
        %v693 = vadd.f32 %v561, %v661
        %v694 = vadd.f32 %v562, %v662
        %v695 = vadd.f32 %v563, %v663
        %v696 = vadd.f32 %v564, %v664
        %v697 = vadd.f32 %v565, %v665
        %v698 = vadd.f32 %v566, %v666
        %v699 = vadd.f32 %v567, %v667
        %v700 = vadd.f32 %v568, %v668
        %v701 = vadd.f32 %v569, %v669
        %v702 = vadd.f32 %v570, %v670
        %v703 = vadd.f32 %v571, %v671
        %v704 = vadd.f32 %v572, %v672
        %v705 = vadd.f32 %v573, %v673
        %v706 = vadd.f32 %v574, %v674
        %v707 = vadd.f32 %v575, %v675
        %v708 = vadd.f32 %v576, %v676
        %v709 = vadd.f32 %v577, %v677
        %v710 = vadd.f32 %v578, %v678
        %v711 = vadd.f32 %v579, %v679
        %v712 = vadd.f32 %v580, %v680
        %v713 = vadd.f32 %v581, %v681
        %v714 = vadd.f32 %v582, %v682
        %v715 = vadd.f32 %v583, %v683
        %v716 = vadd.f32 %v584, %v684
        %v717 = vadd.f32 %v585, %v685
        %v718 = vadd.f32 %v586, %v686
        %v719 = vmax.f32 %v687, 0.0
        %v720 = vmax.f32 %v688, 0.0
        %v721 = vmax.f32 %v689, 0.0
        %v722 = vmax.f32 %v690, 0.0
        %v723 = vmax.f32 %v691, 0.0
        %v724 = vmax.f32 %v692, 0.0
        %v725 = vmax.f32 %v693, 0.0
        %v726 = vmax.f32 %v694, 0.0
        %v727 = vmax.f32 %v695, 0.0
        %v728 = vmax.f32 %v696, 0.0
        %v729 = vmax.f32 %v697, 0.0
        %v730 = vmax.f32 %v698, 0.0
        %v731 = vmax.f32 %v699, 0.0
        %v732 = vmax.f32 %v700, 0.0
        %v733 = vmax.f32 %v701, 0.0
        %v734 = vmax.f32 %v702, 0.0
        %v735 = vmax.f32 %v703, 0.0
        %v736 = vmax.f32 %v704, 0.0
        %v737 = vmax.f32 %v705, 0.0
        %v738 = vmax.f32 %v706, 0.0
        %v739 = vmax.f32 %v707, 0.0
        %v740 = vmax.f32 %v708, 0.0
        %v741 = vmax.f32 %v709, 0.0
        %v742 = vmax.f32 %v710, 0.0
        %v743 = vmax.f32 %v711, 0.0
        %v744 = vmax.f32 %v712, 0.0
        %v745 = vmax.f32 %v713, 0.0
        %v746 = vmax.f32 %v714, 0.0
        %v747 = vmax.f32 %v715, 0.0
        %v748 = vmax.f32 %v716, 0.0
        %v749 = vmax.f32 %v717, 0.0
        %v750 = vmax.f32 %v718, 0.0
        %v751 = vpack.c.bf16 %v723, %v719
        %v752 = vpack.c.bf16 %v724, %v720
        %v753 = vpack.c.bf16 %v725, %v721
        %v754 = vpack.c.bf16 %v726, %v722
        %v755 = vpack.c.bf16 %v731, %v727
        %v756 = vpack.c.bf16 %v732, %v728
        %v757 = vpack.c.bf16 %v733, %v729
        %v758 = vpack.c.bf16 %v734, %v730
        %v759 = vpack.c.bf16 %v739, %v735
        %v760 = vpack.c.bf16 %v740, %v736
        %v761 = vpack.c.bf16 %v741, %v737
        %v762 = vpack.c.bf16 %v742, %v738
        %v763 = vpack.c.bf16 %v747, %v743
        %v764 = vpack.c.bf16 %v748, %v744
        %v765 = vpack.c.bf16 %v749, %v745
        %v766 = vpack.c.bf16 %v750, %v746
        %v767 = vld [vmem:[%s3] sm:$0xf]
        %v768 = vld [vmem:[%s3 + $0x4] sm:$0xf]
        %v769 = vld [vmem:[%s3 + $0x8] sm:$0xf]
        %v770 = vld [vmem:[%s3 + $0xc] sm:$0xf]
        %v771 = vld [vmem:[%s3 + $0x10] sm:$0xf]
        %v772 = vld [vmem:[%s3 + $0x14] sm:$0xf]
        %v773 = vld [vmem:[%s3 + $0x18] sm:$0xf]
        %v774 = vld [vmem:[%s3 + $0x1c] sm:$0xf]
        %v775 = vld [vmem:[%s3 + $0x20] sm:$0xf]
        %v776 = vld [vmem:[%s3 + $0x24] sm:$0xf]
        %v777 = vld [vmem:[%s3 + $0x28] sm:$0xf]
        %v778 = vld [vmem:[%s3 + $0x2c] sm:$0xf]
        %v779 = vld [vmem:[%s3 + $0x30] sm:$0xf]
        %v780 = vld [vmem:[%s3 + $0x34] sm:$0xf]
        %v781 = vld [vmem:[%s3 + $0x38] sm:$0xf]
        %v782 = vld [vmem:[%s3 + $0x3c] sm:$0xf]
        %v783 = vld [vmem:[%s4] sm:$0xff]
        %v784 = vld [vmem:[%s4 + $0x8] sm:$0xff]
        %v785 = vld [vmem:[%s4 + $0x10] sm:$0xff]
        %v786 = vld [vmem:[%s4 + $0x18] sm:$0xff]
        %v787 = vld [vmem:[%s4 + $0x20] sm:$0xff]
        %v788 = vld [vmem:[%s4 + $0x28] sm:$0xff]
        %v789 = vld [vmem:[%s4 + $0x30] sm:$0xff]
        %v790 = vld [vmem:[%s4 + $0x38] sm:$0xff]
        %v791 = vld [vmem:[%s4 + $0x40] sm:$0xff]
        %v792 = vld [vmem:[%s4 + $0x48] sm:$0xff]
        %v793 = vld [vmem:[%s4 + $0x50] sm:$0xff]
        %v794 = vld [vmem:[%s4 + $0x58] sm:$0xff]
        %v795 = vld [vmem:[%s4 + $0x60] sm:$0xff]
        %v796 = vld [vmem:[%s4 + $0x68] sm:$0xff]
        %v797 = vld [vmem:[%s4 + $0x70] sm:$0xff]
        %v798 = vld [vmem:[%s4 + $0x78] sm:$0xff]
        %800 = vset.pattern.permute.xlu0 0
        %801 = vperm.xlu0 %800, %v783
        %v802 = vpop.permute.xlu0 %801
        %805 = vset.pattern.permute.xlu0 0
        %806 = vperm.xlu0 %805, %v784
        %v807 = vpop.permute.xlu0 %806
        %810 = vset.pattern.permute.xlu0 0
        %811 = vperm.xlu0 %810, %v785
        %v812 = vpop.permute.xlu0 %811
        %815 = vset.pattern.permute.xlu0 0
        %816 = vperm.xlu0 %815, %v786
        %v817 = vpop.permute.xlu0 %816
        %820 = vset.pattern.permute.xlu0 0
        %821 = vperm.xlu0 %820, %v787
        %v822 = vpop.permute.xlu0 %821
        %825 = vset.pattern.permute.xlu0 0
        %826 = vperm.xlu0 %825, %v788
        %v827 = vpop.permute.xlu0 %826
        %830 = vset.pattern.permute.xlu0 0
        %831 = vperm.xlu0 %830, %v789
        %v832 = vpop.permute.xlu0 %831
        %835 = vset.pattern.permute.xlu0 0
        %836 = vperm.xlu0 %835, %v790
        %v837 = vpop.permute.xlu0 %836
        %840 = vset.pattern.permute.xlu0 0
        %841 = vperm.xlu0 %840, %v791
        %v842 = vpop.permute.xlu0 %841
        %845 = vset.pattern.permute.xlu0 0
        %846 = vperm.xlu0 %845, %v792
        %v847 = vpop.permute.xlu0 %846
        %850 = vset.pattern.permute.xlu0 0
        %851 = vperm.xlu0 %850, %v793
        %v852 = vpop.permute.xlu0 %851
        %855 = vset.pattern.permute.xlu0 0
        %856 = vperm.xlu0 %855, %v794
        %v857 = vpop.permute.xlu0 %856
        %860 = vset.pattern.permute.xlu0 0
        %861 = vperm.xlu0 %860, %v795
        %v862 = vpop.permute.xlu0 %861
        %865 = vset.pattern.permute.xlu0 0
        %866 = vperm.xlu0 %865, %v796
        %v867 = vpop.permute.xlu0 %866
        %870 = vset.pattern.permute.xlu0 0
        %871 = vperm.xlu0 %870, %v797
        %v872 = vpop.permute.xlu0 %871
        %875 = vset.pattern.permute.xlu0 0
        %876 = vperm.xlu0 %875, %v798
        %v877 = vpop.permute.xlu0 %876
        %v895 = vunpack.c.l.b16 %v767
        %v896 = vunpack.c.l.b16 %v768
        %v897 = vunpack.c.l.b16 %v769
        %v898 = vunpack.c.l.b16 %v770
        %v899 = vunpack.c.l.b16 %v771
        %v900 = vunpack.c.l.b16 %v772
        %v901 = vunpack.c.l.b16 %v773
        %v902 = vunpack.c.l.b16 %v774
        %v903 = vunpack.c.l.b16 %v775
        %v904 = vunpack.c.l.b16 %v776
        %v905 = vunpack.c.l.b16 %v777
        %v906 = vunpack.c.l.b16 %v778
        %v907 = vunpack.c.l.b16 %v779
        %v908 = vunpack.c.l.b16 %v780
        %v909 = vunpack.c.l.b16 %v781
        %v910 = vunpack.c.l.b16 %v782
        %v911 = vpack.c.b16 %v896, %v895
        %v912 = vpack.c.b16 %v898, %v897
        %v913 = vpack.c.b16 %v900, %v899
        %v914 = vpack.c.b16 %v902, %v901
        %v915 = vpack.c.b16 %v904, %v903
        %v916 = vpack.c.b16 %v906, %v905
        %v917 = vpack.c.b16 %v908, %v907
        %v918 = vpack.c.b16 %v910, %v909
        %vm919 = vcmask 523264
        %v921 = vsel %vm919, %v911, 0
        %v924 = vsel %vm919, %v912, 0
        %v927 = vsel %vm919, %v913, 0
        %v930 = vsel %vm919, %v914, 0
        %v933 = vsel %vm919, %v915, 0
        %v936 = vsel %vm919, %v916, 0
        %v939 = vsel %vm919, %v917, 0
        %v942 = vsel %vm919, %v918, 0
        %944 = vmatprep.subr.bf16.mxu0 0
        %945 = vmatpush1.bf16.msra.mxu0 0
        %946 = vmatprep.subr.bf16.mxu0 0
        %947 = vmatpush1.bf16.msra.mxu0 0
        %948 = vmatprep.subr.bf16.mxu0 0
        %949 = vmatpush1.bf16.msra.mxu0 0
        %950 = vmatprep.subr.bf16.mxu0 0
        %951 = vmatpush1.bf16.msra.mxu0 0
        %952 = vmatprep.subr.bf16.mxu0 %v764
        %953 = vmatpush1.bf16.msra.mxu0 %v763
        %954 = vmatprep.subr.bf16.mxu0 %v760
        %955 = vmatpush1.bf16.msra.mxu0 %v759
        %956 = vmatprep.subr.bf16.mxu0 %v756
        %957 = vmatpush1.bf16.msra.mxu0 %v755
        %958 = vmatprep.subr.bf16.mxu0 %v752
        %959 = vmatpush1.bf16.msra.mxu0 %v751
        %960 = vmatprep.subr.bf16.mxu0 0
        %961 = vmatpush2.bf16.msra.mxu0 0
        %962 = vmatprep.subr.bf16.mxu0 0
        %963 = vmatpush2.bf16.msra.mxu0 0
        %964 = vmatprep.subr.bf16.mxu0 0
        %965 = vmatpush2.bf16.msra.mxu0 0
        %966 = vmatprep.subr.bf16.mxu0 0
        %967 = vmatpush2.bf16.msra.mxu0 0
        %968 = vmatprep.subr.bf16.mxu0 0
        %969 = vmatpush2.bf16.msra.mxu0 0
        %970 = vmatprep.subr.bf16.mxu0 0
        %971 = vmatpush2.bf16.msra.mxu0 0
        %972 = vmatprep.subr.bf16.mxu0 0
        %973 = vmatpush2.bf16.msra.mxu0 0
        %974 = vmatprep.subr.bf16.mxu0 0
        %975 = vmatpush2.bf16.msra.mxu0 0
        %976 = vmatprep.mubr.bf16.mxu0 0
        %977 = vmatmul.mubr.bf16.gmra.mxu0 %v921
        %v978 = vpop.f32.mrf.mxu0
        %v979 = vadd.f32 %v802, %v978
        %v980 = vpop.f32.mrf.mxu0
        %v981 = vadd.f32 %v802, %v980
        %v982 = vpop.f32.mrf.mxu0
        %v983 = vadd.f32 %v807, %v982
        %v984 = vpop.f32.mrf.mxu0
        %v985 = vadd.f32 %v807, %v984
        %986 = vmatprep.mubr.bf16.mxu0 0
        %987 = vmatmul.mubr.bf16.gmra.mxu0 %v924
        %v988 = vpop.f32.mrf.mxu0
        %v989 = vadd.f32 %v812, %v988
        %v990 = vpop.f32.mrf.mxu0
        %v991 = vadd.f32 %v812, %v990
        %v992 = vpop.f32.mrf.mxu0
        %v993 = vadd.f32 %v817, %v992
        %v994 = vpop.f32.mrf.mxu0
        %v995 = vadd.f32 %v817, %v994
        %996 = vmatprep.mubr.bf16.mxu0 0
        %997 = vmatmul.mubr.bf16.gmra.mxu0 %v927
        %v998 = vpop.f32.mrf.mxu0
        %v999 = vadd.f32 %v822, %v998
        %v1000 = vpop.f32.mrf.mxu0
        %v1001 = vadd.f32 %v822, %v1000
        %v1002 = vpop.f32.mrf.mxu0
        %v1003 = vadd.f32 %v827, %v1002
        %v1004 = vpop.f32.mrf.mxu0
        %v1005 = vadd.f32 %v827, %v1004
        %1006 = vmatprep.mubr.bf16.mxu0 0
        %1007 = vmatmul.mubr.bf16.gmra.mxu0 %v930
        %v1008 = vpop.f32.mrf.mxu0
        %v1009 = vadd.f32 %v832, %v1008
        %v1010 = vpop.f32.mrf.mxu0
        %v1011 = vadd.f32 %v832, %v1010
        %v1012 = vpop.f32.mrf.mxu0
        %v1013 = vadd.f32 %v837, %v1012
        %v1014 = vpop.f32.mrf.mxu0
        %v1015 = vadd.f32 %v837, %v1014
        %1016 = vmatprep.mubr.bf16.mxu0 0
        %1017 = vmatmul.mubr.bf16.gmra.mxu0 %v933
        %v1018 = vpop.f32.mrf.mxu0
        %v1019 = vadd.f32 %v842, %v1018
        %v1020 = vpop.f32.mrf.mxu0
        %v1021 = vadd.f32 %v842, %v1020
        %v1022 = vpop.f32.mrf.mxu0
        %v1023 = vadd.f32 %v847, %v1022
        %v1024 = vpop.f32.mrf.mxu0
        %v1025 = vadd.f32 %v847, %v1024
        %1026 = vmatprep.mubr.bf16.mxu0 0
        %1027 = vmatmul.mubr.bf16.gmra.mxu0 %v936
        %v1028 = vpop.f32.mrf.mxu0
        %v1029 = vadd.f32 %v852, %v1028
        %v1030 = vpop.f32.mrf.mxu0
        %v1031 = vadd.f32 %v852, %v1030
        %v1032 = vpop.f32.mrf.mxu0
        %v1033 = vadd.f32 %v857, %v1032
        %v1034 = vpop.f32.mrf.mxu0
        %v1035 = vadd.f32 %v857, %v1034
        %1036 = vmatprep.mubr.bf16.mxu0 0
        %1037 = vmatmul.mubr.bf16.gmra.mxu0 %v939
        %v1038 = vpop.f32.mrf.mxu0
        %v1039 = vadd.f32 %v862, %v1038
        %v1040 = vpop.f32.mrf.mxu0
        %v1041 = vadd.f32 %v862, %v1040
        %v1042 = vpop.f32.mrf.mxu0
        %v1043 = vadd.f32 %v867, %v1042
        %v1044 = vpop.f32.mrf.mxu0
        %v1045 = vadd.f32 %v867, %v1044
        %1046 = vmatprep.mubr.bf16.mxu0 0
        %1047 = vmatmul.mubr.bf16.gmra.mxu0 %v942
        %v1048 = vpop.f32.mrf.mxu0
        %v1049 = vadd.f32 %v872, %v1048
        %v1050 = vpop.f32.mrf.mxu0
        %v1051 = vadd.f32 %v872, %v1050
        %v1052 = vpop.f32.mrf.mxu0
        %v1053 = vadd.f32 %v877, %v1052
        %v1054 = vpop.f32.mrf.mxu0
        %v1055 = vadd.f32 %v877, %v1054
        %1056 = vdwg.mxu0
        %1057 = vmatprep.subr.bf16.mxu0 0
        %1058 = vmatpush1.bf16.msra.mxu0 0
        %1059 = vmatprep.subr.bf16.mxu0 0
        %1060 = vmatpush1.bf16.msra.mxu0 0
        %1061 = vmatprep.subr.bf16.mxu0 0
        %1062 = vmatpush1.bf16.msra.mxu0 0
        %1063 = vmatprep.subr.bf16.mxu0 0
        %1064 = vmatpush1.bf16.msra.mxu0 0
        %1065 = vmatprep.subr.bf16.mxu0 %v766
        %1066 = vmatpush1.bf16.msra.mxu0 %v765
        %1067 = vmatprep.subr.bf16.mxu0 %v762
        %1068 = vmatpush1.bf16.msra.mxu0 %v761
        %1069 = vmatprep.subr.bf16.mxu0 %v758
        %1070 = vmatpush1.bf16.msra.mxu0 %v757
        %1071 = vmatprep.subr.bf16.mxu0 %v754
        %1072 = vmatpush1.bf16.msra.mxu0 %v753
        %1073 = vmatprep.subr.bf16.mxu0 0
        %1074 = vmatpush2.bf16.msra.mxu0 0
        %1075 = vmatprep.subr.bf16.mxu0 0
        %1076 = vmatpush2.bf16.msra.mxu0 0
        %1077 = vmatprep.subr.bf16.mxu0 0
        %1078 = vmatpush2.bf16.msra.mxu0 0
        %1079 = vmatprep.subr.bf16.mxu0 0
        %1080 = vmatpush2.bf16.msra.mxu0 0
        %1081 = vmatprep.subr.bf16.mxu0 0
        %1082 = vmatpush2.bf16.msra.mxu0 0
        %1083 = vmatprep.subr.bf16.mxu0 0
        %1084 = vmatpush2.bf16.msra.mxu0 0
        %1085 = vmatprep.subr.bf16.mxu0 0
        %1086 = vmatpush2.bf16.msra.mxu0 0
        %1087 = vmatprep.subr.bf16.mxu0 0
        %1088 = vmatpush2.bf16.msra.mxu0 0
        %1089 = vmatprep.mubr.bf16.mxu0 0
        %1090 = vmatmul.mubr.bf16.gmra.mxu0 %v921
        %v1091 = vpop.f32.mrf.mxu0
        %v1092 = vadd.f32 %v802, %v1091
        %v1093 = vpop.f32.mrf.mxu0
        %v1094 = vadd.f32 %v802, %v1093
        %v1095 = vpop.f32.mrf.mxu0
        %v1096 = vadd.f32 %v807, %v1095
        %v1097 = vpop.f32.mrf.mxu0
        %v1098 = vadd.f32 %v807, %v1097
        %1099 = vmatprep.mubr.bf16.mxu0 0
        %1100 = vmatmul.mubr.bf16.gmra.mxu0 %v924
        %v1101 = vpop.f32.mrf.mxu0
        %v1102 = vadd.f32 %v812, %v1101
        %v1103 = vpop.f32.mrf.mxu0
        %v1104 = vadd.f32 %v812, %v1103
        %v1105 = vpop.f32.mrf.mxu0
        %v1106 = vadd.f32 %v817, %v1105
        %v1107 = vpop.f32.mrf.mxu0
        %v1108 = vadd.f32 %v817, %v1107
        %1109 = vmatprep.mubr.bf16.mxu0 0
        %1110 = vmatmul.mubr.bf16.gmra.mxu0 %v927
        %v1111 = vpop.f32.mrf.mxu0
        %v1112 = vadd.f32 %v822, %v1111
        %v1113 = vpop.f32.mrf.mxu0
        %v1114 = vadd.f32 %v822, %v1113
        %v1115 = vpop.f32.mrf.mxu0
        %v1116 = vadd.f32 %v827, %v1115
        %v1117 = vpop.f32.mrf.mxu0
        %v1118 = vadd.f32 %v827, %v1117
        %1119 = vmatprep.mubr.bf16.mxu0 0
        %1120 = vmatmul.mubr.bf16.gmra.mxu0 %v930
        %v1121 = vpop.f32.mrf.mxu0
        %v1122 = vadd.f32 %v832, %v1121
        %v1123 = vpop.f32.mrf.mxu0
        %v1124 = vadd.f32 %v832, %v1123
        %v1125 = vpop.f32.mrf.mxu0
        %v1126 = vadd.f32 %v837, %v1125
        %v1127 = vpop.f32.mrf.mxu0
        %v1128 = vadd.f32 %v837, %v1127
        %1129 = vmatprep.mubr.bf16.mxu0 0
        %1130 = vmatmul.mubr.bf16.gmra.mxu0 %v933
        %v1131 = vpop.f32.mrf.mxu0
        %v1132 = vadd.f32 %v842, %v1131
        %v1133 = vpop.f32.mrf.mxu0
        %v1134 = vadd.f32 %v842, %v1133
        %v1135 = vpop.f32.mrf.mxu0
        %v1136 = vadd.f32 %v847, %v1135
        %v1137 = vpop.f32.mrf.mxu0
        %v1138 = vadd.f32 %v847, %v1137
        %1139 = vmatprep.mubr.bf16.mxu0 0
        %1140 = vmatmul.mubr.bf16.gmra.mxu0 %v936
        %v1141 = vpop.f32.mrf.mxu0
        %v1142 = vadd.f32 %v852, %v1141
        %v1143 = vpop.f32.mrf.mxu0
        %v1144 = vadd.f32 %v852, %v1143
        %v1145 = vpop.f32.mrf.mxu0
        %v1146 = vadd.f32 %v857, %v1145
        %v1147 = vpop.f32.mrf.mxu0
        %v1148 = vadd.f32 %v857, %v1147
        %1149 = vmatprep.mubr.bf16.mxu0 0
        %1150 = vmatmul.mubr.bf16.gmra.mxu0 %v939
        %v1151 = vpop.f32.mrf.mxu0
        %v1152 = vadd.f32 %v862, %v1151
        %v1153 = vpop.f32.mrf.mxu0
        %v1154 = vadd.f32 %v862, %v1153
        %v1155 = vpop.f32.mrf.mxu0
        %v1156 = vadd.f32 %v867, %v1155
        %v1157 = vpop.f32.mrf.mxu0
        %v1158 = vadd.f32 %v867, %v1157
        %1159 = vmatprep.mubr.bf16.mxu0 0
        %1160 = vmatmul.mubr.bf16.gmra.mxu0 %v942
        %v1161 = vpop.f32.mrf.mxu0
        %v1162 = vadd.f32 %v872, %v1161
        %v1163 = vpop.f32.mrf.mxu0
        %v1164 = vadd.f32 %v872, %v1163
        %v1165 = vpop.f32.mrf.mxu0
        %v1166 = vadd.f32 %v877, %v1165
        %v1167 = vpop.f32.mrf.mxu0
        %v1168 = vadd.f32 %v877, %v1167
        %1169 = vdwg.mxu0
        %1170 = vst [vmem:[%s242] sm:$0xff] %v979
        %1171 = vst [vmem:[%s242 + $0x8] sm:$0xff] %v981
        %1172 = vst [vmem:[%s242 + $0x10] sm:$0xff] %v1092
        %1173 = vst [vmem:[%s242 + $0x18] sm:$0xff] %v1094
        %1174 = vst [vmem:[%s242 + $0x20] sm:$0xff] %v983
        %1175 = vst [vmem:[%s242 + $0x28] sm:$0xff] %v985
        %1176 = vst [vmem:[%s242 + $0x30] sm:$0xff] %v1096
        %1177 = vst [vmem:[%s242 + $0x38] sm:$0xff] %v1098
        %1178 = vst [vmem:[%s242 + $0x40] sm:$0xff] %v989
        %1179 = vst [vmem:[%s242 + $0x48] sm:$0xff] %v991
        %1180 = vst [vmem:[%s242 + $0x50] sm:$0xff] %v1102
        %1181 = vst [vmem:[%s242 + $0x58] sm:$0xff] %v1104
        %1182 = vst [vmem:[%s242 + $0x60] sm:$0xff] %v993
        %1183 = vst [vmem:[%s242 + $0x68] sm:$0xff] %v995
        %1184 = vst [vmem:[%s242 + $0x70] sm:$0xff] %v1106
        %1185 = vst [vmem:[%s242 + $0x78] sm:$0xff] %v1108
        %1186 = vst [vmem:[%s242 + $0x80] sm:$0xff] %v999
        %1187 = vst [vmem:[%s242 + $0x88] sm:$0xff] %v1001
        %1188 = vst [vmem:[%s242 + $0x90] sm:$0xff] %v1112
        %1189 = vst [vmem:[%s242 + $0x98] sm:$0xff] %v1114
        %1190 = vst [vmem:[%s242 + $0xa0] sm:$0xff] %v1003
        %1191 = vst [vmem:[%s242 + $0xa8] sm:$0xff] %v1005
        %1192 = vst [vmem:[%s242 + $0xb0] sm:$0xff] %v1116
        %1193 = vst [vmem:[%s242 + $0xb8] sm:$0xff] %v1118
        %1194 = vst [vmem:[%s242 + $0xc0] sm:$0xff] %v1009
        %1195 = vst [vmem:[%s242 + $0xc8] sm:$0xff] %v1011
        %1196 = vst [vmem:[%s242 + $0xd0] sm:$0xff] %v1122
        %1197 = vst [vmem:[%s242 + $0xd8] sm:$0xff] %v1124
        %1198 = vst [vmem:[%s242 + $0xe0] sm:$0xff] %v1013
        %1199 = vst [vmem:[%s242 + $0xe8] sm:$0xff] %v1015
        %1200 = vst [vmem:[%s242 + $0xf0] sm:$0xff] %v1126
        %1201 = vst [vmem:[%s242 + $0xf8] sm:$0xff] %v1128
        %1202 = vst [vmem:[%s242 + $0x100] sm:$0xff] %v1019
        %1203 = vst [vmem:[%s242 + $0x108] sm:$0xff] %v1021
        %1204 = vst [vmem:[%s242 + $0x110] sm:$0xff] %v1132
        %1205 = vst [vmem:[%s242 + $0x118] sm:$0xff] %v1134
        %1206 = vst [vmem:[%s242 + $0x120] sm:$0xff] %v1023
        %1207 = vst [vmem:[%s242 + $0x128] sm:$0xff] %v1025
        %1208 = vst [vmem:[%s242 + $0x130] sm:$0xff] %v1136
        %1209 = vst [vmem:[%s242 + $0x138] sm:$0xff] %v1138
        %1210 = vst [vmem:[%s242 + $0x140] sm:$0xff] %v1029
        %1211 = vst [vmem:[%s242 + $0x148] sm:$0xff] %v1031
        %1212 = vst [vmem:[%s242 + $0x150] sm:$0xff] %v1142
        %1213 = vst [vmem:[%s242 + $0x158] sm:$0xff] %v1144
        %1214 = vst [vmem:[%s242 + $0x160] sm:$0xff] %v1033
        %1215 = vst [vmem:[%s242 + $0x168] sm:$0xff] %v1035
        %1216 = vst [vmem:[%s242 + $0x170] sm:$0xff] %v1146
        %1217 = vst [vmem:[%s242 + $0x178] sm:$0xff] %v1148
        %1218 = vst [vmem:[%s242 + $0x180] sm:$0xff] %v1039
        %1219 = vst [vmem:[%s242 + $0x188] sm:$0xff] %v1041
        %1220 = vst [vmem:[%s242 + $0x190] sm:$0xff] %v1152
        %1221 = vst [vmem:[%s242 + $0x198] sm:$0xff] %v1154
        %1222 = vst [vmem:[%s242 + $0x1a0] sm:$0xff] %v1043
        %1223 = vst [vmem:[%s242 + $0x1a8] sm:$0xff] %v1045
        %1224 = vst [vmem:[%s242 + $0x1b0] sm:$0xff] %v1156
        %1225 = vst [vmem:[%s242 + $0x1b8] sm:$0xff] %v1158
        %1226 = vst [vmem:[%s242 + $0x1c0] sm:$0xff] %v1049
        %1227 = vst [vmem:[%s242 + $0x1c8] sm:$0xff] %v1051
        %1228 = vst [vmem:[%s242 + $0x1d0] sm:$0xff] %v1162
        %1229 = vst [vmem:[%s242 + $0x1d8] sm:$0xff] %v1164
        %1230 = vst [vmem:[%s242 + $0x1e0] sm:$0xff] %v1053
        %1231 = vst [vmem:[%s242 + $0x1e8] sm:$0xff] %v1055
        %1232 = vst [vmem:[%s242 + $0x1f0] sm:$0xff] %v1166
        %1233 = vst [vmem:[%s242 + $0x1f8] sm:$0xff] %v1168
        %s1234 = sand.u32 %s153, 1
        %s1235 = scalar_lea.sflag [#allocation3], %s1234
        %s1236 = sand.u32 %s153, 1
        %s1237 = smul.addr %s1236, 512
        %s1238 = scalar_lea.vmem [#allocation2], %s1237
        // Predicated region
        $region41: #{tpu_custom_call.1} parent=39 // pred_check
          %p1239 = pneg %p163
        $region42: #{tpu_custom_call.1} parent=39 // pred_check_branch
          %1241 = sbr.rel (%p1239) target = $region44
        $region43: #{tpu_custom_call.1} parent=39 // pred_region
          %s1242 = smul.u32 4, %s24
          %s1244 = ssub.s32 8192, 8192
          %1245 = vsyncadd %s1235, %s1244
          %s1246 = smul.addr %s23, 64
          %s1247 = sadd.s32 %s1242, %s1246
          %s1248 = smul.addr %s1247, 128
          %s1249 = scalar_lea.hbm %s5, %s1248
          %s1250 = sshll.u32 %s1238, 4
          %s1251 = int_to_ptr.vmem [resolvable:$true] %s1250
          %1256 = dma.vmem_to_hbm [thread:$0]  %s1251, 8192, %s1249, %s1235, 512, 512, 32
        $region44: #{tpu_custom_call.1} parent=39 // pred_fallthru
          _
      $region40: #{tpu_custom_call.1} parent=5 // pred_fallthru
        _
      %p1257 = scmp.le.s32.totalorder 2, %s14
      // Predicated region
      $region45: #{tpu_custom_call.1} parent=5 // pred_check
        %p1258 = pneg %p1257
      $region46: #{tpu_custom_call.1} parent=5 // pred_check_branch
        %1260 = sbr.rel (%p1258) target = $region48
      $region47: #{tpu_custom_call.1} parent=5 // pred_region
        %s1261 = ssub.s32 %s14, 2
        // Predicated region
        $region49: #{tpu_custom_call.1} parent=47 // pred_check
          %p1262 = pneg %p169
        $region50: #{tpu_custom_call.1} parent=47 // pred_check_branch
          %1264 = sbr.rel (%p1262) target = $region52
        $region51: #{tpu_custom_call.1} parent=47 // pred_region
          %s1265 = sand.u32 %s154, 1
          %s1266 = scalar_lea.sflag [#allocation3], %s1265
          %s1267 = sand.u32 %s154, 1
          %s1268 = smul.addr %s1267, 512
          %s1269 = scalar_lea.vmem [#allocation2], %s1268
          %1270 = dma.done %s1266, 8192
        $region52: #{tpu_custom_call.1} parent=47 // pred_fallthru
          _
      $region48: #{tpu_custom_call.1} parent=5 // pred_fallthru
        _
    $region6: #{tpu_custom_call.1} parent=1 // loop_footer
      %s18 = sadd.s32 1, %s14
    $region7: #{tpu_custom_call.1} parent=1 // loop_footer_branch
      %13 = sbr.rel target = $region3
    $region8: #{tpu_custom_call.1} parent=1 // loop_exit
      _
    %1271 = vsyncpa [#allocation3], 1
    %s1272 = scalar_lea.sflag [#allocation3], 1
    %1273 = vsyncpa %s1272, 1

</llo_original>
